<compile_context>
chip_gen: v7x
topology: tpu7x:2x2x1
jax: 0.10.0
libtpu: 0.0.40
codegen_flags: <defaults>
</compile_context>

<pallas_src>
import jax
import jax.numpy as jnp
from jax import lax
from jax.experimental import pallas as pl
from jax.experimental.pallas import tpu as pltpu


def _round_up(x, m):
    return (x + m - 1) // m * m


def _patch_embed_kernel(x_ref, w_ref, b_ref, o_ref):
    # x_ref: (TM, K) bf16 patch rows, w_ref: (K, E_pad) bf16,
    # b_ref: (1, E_pad) f32, o_ref: (TM, E_pad) f32.
    acc = jnp.dot(x_ref[...], w_ref[...], preferred_element_type=jnp.float32)
    o_ref[...] = (acc + b_ref[...]).astype(o_ref.dtype)


def patch_embed_gemm(patches, w2d_padded, bias2d_padded, e_out, *,
                     tile_m=256, compute_dtype=jnp.bfloat16,
                     out_dtype=jnp.float32):
    """patches: (M, K); w2d_padded: (K, E_pad) compute_dtype;
    bias2d_padded: (1, E_pad) f32.  Returns (M, e_out) out_dtype."""
    M, K = patches.shape
    K2, E_pad = w2d_padded.shape
    assert K == K2 and E_pad % 128 == 0

    # Big tiles for real workloads, but don't blow small problems up 8x.
    # (On v7x keep the grid length >= ~8 so both TensorCores stay busy; the
    # min() below already caps the tile for small M.)
    tile_m_eff = min(tile_m, _round_up(M, 8))
    M_pad = _round_up(M, tile_m_eff)

    p = patches.astype(compute_dtype)
    if M_pad != M:
        p = jnp.pad(p, ((0, M_pad - M), (0, 0)))

    out = pl.pallas_call(
        _patch_embed_kernel,
        out_shape=jax.ShapeDtypeStruct((M_pad, E_pad), out_dtype),
        grid_spec=pltpu.PrefetchScalarGridSpec(
            num_scalar_prefetch=0,
            grid=(M_pad // tile_m_eff,),
            in_specs=[
                pl.BlockSpec((tile_m_eff, K), lambda i: (i, 0)),
                pl.BlockSpec((K, E_pad), lambda i: (0, 0)),   # W resident
                pl.BlockSpec((1, E_pad), lambda i: (0, 0)),
            ],
            out_specs=pl.BlockSpec((tile_m_eff, E_pad), lambda i: (i, 0)),
        ),
        compiler_params=pltpu.CompilerParams(
            dimension_semantics=("parallel",),
            # Let XLA fuse the patch-extraction transpose/reshape/cast/pad
            # into the kernel's input pipeline (no extra HBM round-trip).
            allow_input_fusion=[True, False, False],
        ),
    )(p, w2d_padded, bias2d_padded)
    return out[:M, :e_out]


class PatchEmbedPallas:
    """JAX/Pallas equivalent of the PyTorch PatchEmbed forward pass."""

    def __init__(self, image_size, patch_size, in_c, embed_dim,
                 layer_norm=None, image_embed=None, *, key=None,
                 tile_m=256, compute_dtype=jnp.bfloat16):
        self.image_size = (image_size, image_size)
        self.patch_size = (patch_size, patch_size)
        self.in_c = in_c
        self.embed_dim = embed_dim
        self.image_embed = image_embed
        self.tile_m = tile_m
        self.compute_dtype = compute_dtype
        # layer_norm=None in the reference resolves to nn.Identity -> no-op.
        # TODO(synk): reference stores the nn.Identity *class* (not instance);
        # we implement the intended identity behavior instead of that bug.

        if key is None:
            key = jax.random.PRNGKey(0)
        k1, k2, k3, k4 = jax.random.split(key, 4)
        ph, pw = self.patch_size
        fan_in = in_c * ph * pw
        bound = 1.0 / (fan_in ** 0.5)
        wshape = (embed_dim, in_c, ph, pw)
        # Deterministic init (PyTorch Conv2d default: U(-bound, bound)).
        self.image_proj_w = jax.random.uniform(k1, wshape, jnp.float32, -bound, bound)
        self.image_proj_b = jax.random.uniform(k2, (embed_dim,), jnp.float32, -bound, bound)
        self.template_proj_w = jax.random.uniform(k3, wshape, jnp.float32, -bound, bound)
        self.template_proj_b = jax.random.uniform(k4, (embed_dim,), jnp.float32, -bound, bound)

        # Precompute (K, E_pad) GEMM weights + padded bias once (hoisted out
        # of __call__): reshape/transpose, cast to compute dtype, pad E to a
        # lane-dense multiple of 128.
        self._e_pad = _round_up(embed_dim, 128)
        self._image_w2d, self._image_b2d = self._prep(self.image_proj_w, self.image_proj_b)
        self._template_w2d, self._template_b2d = self._prep(self.template_proj_w, self.template_proj_b)

    def _prep(self, w, b):
        E = self.embed_dim
        e_pad = self._e_pad
        w2d = w.reshape(E, -1).T.astype(self.compute_dtype)       # (K, E)
        b2d = b.astype(jnp.float32).reshape(1, E)
        if e_pad != E:
            w2d = jnp.pad(w2d, ((0, 0), (0, e_pad - E)))
            b2d = jnp.pad(b2d, ((0, 0), (0, e_pad - E)))
        return w2d, b2d

    def _extract_patches(self, x):
        # x: (B, C, H, W) NCHW -> (B*Np, C*ph*pw), flattened in (c, u, v)
        # order to match PyTorch conv-weight flattening; patch order is
        # row-major over (gy, gx), matching conv-output flatten(2).
        B, C, H, W = x.shape
        ph, pw = self.patch_size
        gy, gx = H // ph, W // pw
        xp = x.reshape(B, C, gy, ph, gx, pw)
        xp = xp.transpose(0, 2, 4, 1, 3, 5)            # (B, gy, gx, C, ph, pw)
        return xp.reshape(B * gy * gx, C * ph * pw), (B, gy * gx)

    def __call__(self, x):
        B, C, H, W = x.shape
        if self.image_embed:
            assert H == self.image_size[0] and W == self.image_size[1]
            w2d, b2d = self._image_w2d, self._image_b2d
        else:
            assert H == self.patch_size[0] and W == self.patch_size[1]
            w2d, b2d = self._template_w2d, self._template_b2d

        patches, (B_, Np) = self._extract_patches(x)
        out = patch_embed_gemm(patches, w2d, b2d, self.embed_dim,
                               tile_m=self.tile_m,
                               compute_dtype=self.compute_dtype)
        return out.reshape(B_, Np, self.embed_dim)     # identity "norm"


def _reference_conv_path(x, w, b):
    # Pure-JAX f32 reference of the PyTorch forward (conv -> flatten(2) -> T).
    y = lax.conv_general_dilated(
        x, w, window_strides=w.shape[2:], padding="VALID",
        dimension_numbers=("NCHW", "OIHW", "NCHW"),
    ) + b.reshape(1, -1, 1, 1)
    B, E, gy, gx = y.shape
    return y.reshape(B, E, gy * gx).transpose(0, 2, 1)


if __name__ == "__main__":
    # Small shapes consistent with the module: image_size=16, patch_size=4,
    # in_c=4, embed_dim=32, batch=2, image_embed=True path.
    B, C, HW, P, E = 2, 4, 16, 4, 32
    key = jax.random.PRNGKey(0)
    kx, kp = jax.random.split(key)
    x = jax.random.normal(kx, (B, C, HW, HW), jnp.float32)

    mod = PatchEmbedPallas(image_size=HW, patch_size=P, in_c=C, embed_dim=E,
                           layer_norm=None, image_embed=True, key=kp)

    fwd = jax.jit(mod.__call__)      # jit so input fusion can actually apply
    out = jax.block_until_ready(fwd(x))
    assert out.shape == (B, (HW // P) ** 2, E), out.shape

    # Exact-path reference: same bf16-cast operands, f32 accumulation.
    patches, _ = mod._extract_patches(x)
    ref_bf16 = (jnp.dot(patches.astype(jnp.bfloat16),
                        mod.image_proj_w.reshape(E, -1).T.astype(jnp.bfloat16),
                        preferred_element_type=jnp.float32)
                + mod.image_proj_b.reshape(1, E)).reshape(B, -1, E)
    assert jnp.allclose(out, ref_bf16, atol=2e-3, rtol=2e-3), \
        float(jnp.max(jnp.abs(out - ref_bf16)))

    # Semantics check vs. the f32 conv path (looser tolerance for bf16 MXU).
    ref_f32 = _reference_conv_path(x, mod.image_proj_w, mod.image_proj_b)
    assert jnp.allclose(out, ref_f32, atol=5e-2, rtol=5e-2), \
        float(jnp.max(jnp.abs(out - ref_f32)))

    print("KERNEL_OK")
</pallas_src>

<mosaic_0001>
module attributes {stable_mosaic.version = 11 : i64} {
  func.func @_patch_embed_kernel(%arg0: i32, %arg1: memref<32x64xbf16, #tpu.memory_space<vmem>>, %arg2: memref<64x128xbf16, #tpu.memory_space<vmem>>, %arg3: memref<1x128xf32, #tpu.memory_space<vmem>>, %arg4: memref<32x128xf32, #tpu.memory_space<vmem>>) attributes {dimension_semantics = [#tpu.dimension_semantics<parallel>], iteration_bounds = array<i64: 1>, scalar_prefetch = 0 : i64, scratch_operands = 0 : i64, tpu.core_type = #tpu.core_type<tc>, window_params = [{transform_indices = @transform_0, window_bounds = array<i64: 32, 64>}, {pipeline_mode = #tpu.pipeline_mode<synchronous>, transform_indices = @transform_1, window_bounds = array<i64: 64, 128>}, {pipeline_mode = #tpu.pipeline_mode<synchronous>, transform_indices = @transform_2, window_bounds = array<i64: 1, 128>}, {transform_indices = @transform_3, window_bounds = array<i64: 32, 128>}]} {
    %c0 = arith.constant 0 : index
    %c0_0 = arith.constant 0 : index
    %0 = vector.load %arg1[%c0, %c0_0] : memref<32x64xbf16, #tpu.memory_space<vmem>>, vector<32x64xbf16>
    %c0_1 = arith.constant 0 : index
    %c0_2 = arith.constant 0 : index
    %1 = vector.load %arg2[%c0_1, %c0_2] : memref<64x128xbf16, #tpu.memory_space<vmem>>, vector<64x128xbf16>
    %cst = arith.constant dense<0.000000e+00> : vector<32x128xf32>
    %2 = tpu.matmul %0, %1, %cst {dimension_numbers = #tpu.dot_dimension_numbers<[1], [0], [0], [1], [0, 0, 1, 1], [], []>} : vector<32x64xbf16>, vector<64x128xbf16>, vector<32x128xf32> -> vector<32x128xf32>
    %c0_3 = arith.constant 0 : index
    %c0_4 = arith.constant 0 : index
    %3 = vector.load %arg3[%c0_3, %c0_4] : memref<1x128xf32, #tpu.memory_space<vmem>>, vector<1x128xf32>
    %4 = vector.broadcast %3 : vector<1x128xf32> to vector<32x128xf32>
    %5 = arith.addf %2, %4 : vector<32x128xf32>
    %c0_5 = arith.constant 0 : index
    %c0_6 = arith.constant 0 : index
    %6 = vector.load %arg4[%c0_5, %c0_6] : memref<32x128xf32, #tpu.memory_space<vmem>>, vector<32x128xf32>
    tpu.vector_store %arg4[%c0_5, %c0_6], %5 {strides = array<i32>} : memref<32x128xf32, #tpu.memory_space<vmem>>, vector<32x128xf32>,
    return
  }
  func.func @transform_0(%arg0: i32) -> (i32, i32) {
    %c0_i32 = arith.constant 0 : i32
    %c0_i32_0 = arith.constant 0 : i32
    return %arg0, %c0_i32 : i32, i32
  }
  func.func @transform_1(%arg0: i32) -> (i32, i32) {
    %c0_i32 = arith.constant 0 : i32
    %c0_i32_0 = arith.constant 0 : i32
    %c0_i32_1 = arith.constant 0 : i32
    return %c0_i32, %c0_i32_0 : i32, i32
  }
  func.func @transform_2(%arg0: i32) -> (i32, i32) {
    %c0_i32 = arith.constant 0 : i32
    %c0_i32_0 = arith.constant 0 : i32
    %c0_i32_1 = arith.constant 0 : i32
    return %c0_i32, %c0_i32_0 : i32, i32
  }
  func.func @transform_3(%arg0: i32) -> (i32, i32) {
    %c0_i32 = arith.constant 0 : i32
    %c0_i32_0 = arith.constant 0 : i32
    return %arg0, %c0_i32 : i32, i32
  }
}

</mosaic_0001>

<llo_original>
// kernel: a_call__.1
$region0: #{a_call__.1}
  #allocation0 [shape = 'u32[]', space=smem, size = 0x4, offset = 0x4, fixed_abs, tag = 'smem constant byte address 0x4 - core index']
  #allocation1 [shape = 'u32[144,128]{1,0:T(1,128)}', space=vmem, size = 0x12000, scoped, tag = 'internal scratch']
  %s0 = inlined_call_operand.vmem [shape: bf16[32,64], index: 0, kind: input, shape index: {}]
  %s1 = inlined_call_operand.vmem [shape: bf16[64,128], index: 1, kind: input, shape index: {}]
  %s2 = inlined_call_operand.vmem [shape: f32[1,128], index: 2, kind: input, shape index: {}]
  %s3 = inlined_call_operand.hbm [shape: f32[32,128], index: 3, kind: output, shape index: {}]
  %s4 = sld [smem:[#allocation0]]
  $region22: #{a_call__.1} parent=0
    _
  %s6 = ssub.s32 1, %s4
  %s7 = scalar_select 0, %s6, %s4
  $region1: #{a_call__.1} parent=0
    #allocation2 [shape = 'u8[16384]{0}', space=vmem, size = 0x4000, scoped, tag = 'output window, operand 0, single buffered']
    #allocation3 [shape = 's32[1]{0}', space=sflag, size = 0x4, scoped, tag = 'scoped memory for a_call__.1']
    %8 = vsyncpa [#allocation3], 0
    // Predicated region
    $region2: #{a_call__.1} parent=1 // pred_check
      _
    $region3: #{a_call__.1} parent=1 // pred_check_branch
      %10 = sbr.rel (0) target = $region5
    $region4: #{a_call__.1} parent=1 // pred_region
      _
    $region5: #{a_call__.1} parent=1 // pred_fallthru
      _
    // Predicated region
    $region6: #{a_call__.1} parent=1 // pred_check
      _
    $region7: #{a_call__.1} parent=1 // pred_check_branch
      %12 = sbr.rel (0) target = $region9
    $region8: #{a_call__.1} parent=1 // pred_region
      _
    $region9: #{a_call__.1} parent=1 // pred_fallthru
      _
    // Predicated region
    $region10: #{a_call__.1} parent=1 // pred_check
      _
    $region11: #{a_call__.1} parent=1 // pred_check_branch
      %14 = sbr.rel (0) target = $region13
    $region12: #{a_call__.1} parent=1 // pred_region
      _
    $region13: #{a_call__.1} parent=1 // pred_fallthru
      _
    %v16 = vld [vmem:[%s0] sm:$0xf]
    %v17 = vld [vmem:[%s0 + $0x4] sm:$0xf]
    %v18 = vld [vmem:[%s0 + $0x8] sm:$0xf]
    %v19 = vld [vmem:[%s0 + $0xc] sm:$0xf]
    %v20 = vld [vmem:[%s1] sm:$0xf]
    %v21 = vld [vmem:[%s1 + $0x4] sm:$0xf]
    %v22 = vld [vmem:[%s1 + $0x8] sm:$0xf]
    %v23 = vld [vmem:[%s1 + $0xc] sm:$0xf]
    %v24 = vld [vmem:[%s1 + $0x10] sm:$0xf]
    %v25 = vld [vmem:[%s1 + $0x14] sm:$0xf]
    %v26 = vld [vmem:[%s1 + $0x18] sm:$0xf]
    %v27 = vld [vmem:[%s1 + $0x1c] sm:$0xf]
    %v28 = vld [vmem:[%s2] sm:$0x1]
    %v30 = vlaneseq
    %v31 = vshrl.u32 %v30, 7
    %v32 = vsub.s32 0, %v31
    %v33 = vrot.slane %v28, %v32
    %v39 = vunpack.c.l.b16 %v16
    %v40 = vunpack.c.l.b16 %v17
    %v41 = vunpack.c.l.b16 %v18
    %v42 = vunpack.c.l.b16 %v19
    %v43 = vpack.c.b16 %v40, %v39
    %v44 = vpack.c.b16 %v42, %v41
    %v53 = vunpack.c.l.b16 %v20
    %v54 = vunpack.c.l.b16 %v21
    %v55 = vunpack.c.l.b16 %v22
    %v56 = vunpack.c.l.b16 %v23
    %v57 = vunpack.c.l.b16 %v24
    %v58 = vunpack.c.l.b16 %v25
    %v59 = vunpack.c.l.b16 %v26
    %v60 = vunpack.c.l.b16 %v27
    %v61 = vpack.c.b16 %v54, %v53
    %v62 = vpack.c.b16 %v56, %v55
    %v63 = vpack.c.b16 %v58, %v57
    %v64 = vpack.c.b16 %v60, %v59
    %vm69 = vcmask 523264
    %v71 = vsel %vm69, %v43, 0
    %v74 = vsel %vm69, %v44, 0
    %76 = vmatprep.subr.bf16.mxu0 0
    %77 = vmatpush1.bf16.msra.mxu0 %v61
    %78 = vmatprep.subr.bf16.mxu0 0
    %79 = vmatpush1.bf16.msra.mxu0 %v62
    %80 = vmatprep.subr.bf16.mxu0 0
    %81 = vmatpush1.bf16.msra.mxu0 %v63
    %82 = vmatprep.subr.bf16.mxu0 0
    %83 = vmatpush1.bf16.msra.mxu0 %v64
    %84 = vmatprep.subr.bf16.mxu0 0
    %85 = vmatpush1.bf16.msra.mxu0 0
    %86 = vmatprep.subr.bf16.mxu0 0
    %87 = vmatpush1.bf16.msra.mxu0 0
    %88 = vmatprep.subr.bf16.mxu0 0
    %89 = vmatpush1.bf16.msra.mxu0 0
    %90 = vmatprep.subr.bf16.mxu0 0
    %91 = vmatpush1.bf16.msra.mxu0 0
    %92 = vmatprep.subr.bf16.mxu0 0
    %93 = vmatpush1.bf16.msra.mxu0 0
    %94 = vmatprep.subr.bf16.mxu0 0
    %95 = vmatpush1.bf16.msra.mxu0 0
    %96 = vmatprep.subr.bf16.mxu0 0
    %97 = vmatpush1.bf16.msra.mxu0 0
    %98 = vmatprep.subr.bf16.mxu0 0
    %99 = vmatpush1.bf16.msra.mxu0 0
    %100 = vmatprep.subr.bf16.mxu0 0
    %101 = vmatpush1.bf16.msra.mxu0 0
    %102 = vmatprep.subr.bf16.mxu0 0
    %103 = vmatpush1.bf16.msra.mxu0 0
    %104 = vmatprep.subr.bf16.mxu0 0
    %105 = vmatpush1.bf16.msra.mxu0 0
    %106 = vmatprep.subr.bf16.mxu0 0
    %107 = vmatpush1.bf16.msra.mxu0 0
    %108 = vmatprep.mubr.bf16.mxu0 0
    %109 = vmatmul.mubr.bf16.gmra.mrb[0].mxu0 %v71
    %v110 = vpop.f32.mrb[0].mxu0
    %v111 = vadd.f32 %v33, %v110
    %v112 = vpop.f32.mrb[0].mxu0
    %v113 = vpop.f32.mrb[0].mxu0
    %v114 = vadd.f32 %v33, %v113
    %v115 = vpop.f32.mrb[0].mxu0
    %116 = vmatprep.mubr.bf16.mxu0 0
    %117 = vmatmul.mubr.bf16.gmra.mrb[0].mxu0 %v74
    %v118 = vpop.f32.mrb[0].mxu0
    %v119 = vadd.f32 %v33, %v118
    %v120 = vpop.f32.mrb[0].mxu0
    %v121 = vpop.f32.mrb[0].mxu0
    %v122 = vadd.f32 %v33, %v121
    %v123 = vpop.f32.mrb[0].mxu0
    %124 = vdwg.mxu0
    %125 = vst [vmem:[#allocation2] sm:$0xff] %v111
    %126 = vst [vmem:[#allocation2 + $0x8] sm:$0xff] %v114
    %127 = vst [vmem:[#allocation2 + $0x10] sm:$0xff] %v119
    %128 = vst [vmem:[#allocation2 + $0x18] sm:$0xff] %v122
    // Predicated region
    $region14: #{a_call__.1} parent=1 // pred_check
      _
    $region15: #{a_call__.1} parent=1 // pred_check_branch
      %130 = sbr.rel (0) target = $region17
    $region16: #{a_call__.1} parent=1 // pred_region
      %s132 = ssub.s32 512, 512
      %133 = vsyncadd [#allocation3], %s132
      %s134 = sshll.u32 [#allocation2], 4
      %s135 = int_to_ptr.vmem [resolvable:$true] %s134
      %140 = dma.vmem_to_hbm [thread:$0]  %s135, 512, %s3, [#allocation3], 128, 128, 8
    $region17: #{a_call__.1} parent=1 // pred_fallthru
      _
    // Predicated region
    $region18: #{a_call__.1} parent=1 // pred_check
      _
    $region19: #{a_call__.1} parent=1 // pred_check_branch
      %142 = sbr.rel (0) target = $region21
    $region20: #{a_call__.1} parent=1 // pred_region
      %143 = dma.done [#allocation3], 512
    $region21: #{a_call__.1} parent=1 // pred_fallthru
      _
    %144 = vsyncpa [#allocation3], 1

</llo_original>
